<compile_context>
chip_gen: v7x
topology: tpu7x:2x2x1
jax: 0.10.0
libtpu: 0.0.40
codegen_flags: <defaults>
</compile_context>

<pallas_src>
import numpy as np
import jax
import jax.numpy as jnp
from jax.experimental import pallas as pl
from jax.experimental.pallas import tpu as pltpu


def _mask_rows_kernel(x_ref, valid_ref, o_ref):
    """o = where(row_valid, x, 0).

    x_ref, o_ref : VMEM (TILE_R, TILE_D)
    valid_ref    : VMEM (TILE_R, 1) int32 (nonzero -> keep row)
    """
    keep = valid_ref[...] != 0
    o_ref[...] = jnp.where(keep, x_ref[...], jnp.zeros((), x_ref.dtype))


def _pick_tiles(n_rows, d, itemsize, budget_bytes=2 * 1024 * 1024):
    """Fixed-byte-budget row tiling, dtype-aligned sublanes, lane-dense cols."""
    sub = max(8, 32 // itemsize)  # sublane multiple: 8 f32, 16 bf16, 32 int8
    if d % 128 == 0 and d * itemsize * sub > budget_bytes:
        tile_d = min(d, max(128, ((budget_bytes // (sub * itemsize)) // 128) * 128))
    else:
        tile_d = d  # full extent along lanes -> always a legal block dim
    tile_r = budget_bytes // max(tile_d * itemsize, 1)
    if tile_r >= n_rows:
        tile_r = n_rows  # full extent -> always legal, no wasted VMEM
    else:
        tile_r = max(sub, (tile_r // sub) * sub)
    return tile_r, tile_d


def squeeze_embedding(x, x_len, batch_first=True, max_len=None):
    """JAX/Pallas equivalent of SqueezeEmbedding.forward.

    x       : (B, T, D) if batch_first else (T, B, D)
    x_len   : (B,) integer lengths, x_len[b] <= T.  Prefer host values
              (numpy / list); a device array forces one host sync because the
              output length max(x_len) is data-dependent.
    max_len : optional static int.  Pass it to avoid the host sync entirely
              (e.g. under jit with a known bound).
    returns : (B, T_max, D) (or (T_max, B, D) if not batch_first) with
              positions t >= x_len[b] zeroed, T_max = max(x_len).
    """
    # -- data-dependent output length: host-side glue ------------------------
    if max_len is None:
        if isinstance(x_len, (list, tuple, np.ndarray)):
            max_len = int(np.max(np.asarray(x_len)))      # no device round trip
        else:
            max_len = int(jnp.max(x_len))                 # unavoidable sync
    max_len = int(max_len)

    lens = jnp.asarray(x_len, dtype=jnp.int32)

    time_axis = 1 if batch_first else 0
    if max_len < x.shape[time_axis]:
        x = jax.lax.slice_in_dim(x, 0, max_len, axis=time_axis)

    if batch_first:
        B, T, D = x.shape
        # rows ordered (b, t)
        valid = jnp.arange(T, dtype=jnp.int32)[None, :] < lens[:, None]
    else:
        T, B, D = x.shape
        # rows ordered (t, b) -- no transpose of the data needed
        valid = jnp.arange(T, dtype=jnp.int32)[:, None] < lens[None, :]

    n_rows = B * T
    x2d = x.reshape(n_rows, D)                          # free: merges leading dims
    valid2d = valid.astype(jnp.int32).reshape(n_rows, 1)

    itemsize = jnp.dtype(x.dtype).itemsize
    tile_r, tile_d = _pick_tiles(n_rows, D, itemsize)
    grid = (pl.cdiv(n_rows, tile_r), pl.cdiv(D, tile_d))

    out2d = pl.pallas_call(
        _mask_rows_kernel,
        out_shape=jax.ShapeDtypeStruct((n_rows, D), x.dtype),
        grid=grid,
        in_specs=[
            pl.BlockSpec((tile_r, tile_d), lambda i, j: (i, j)),
            pl.BlockSpec((tile_r, 1), lambda i, j: (i, 0)),
        ],
        out_specs=pl.BlockSpec((tile_r, tile_d), lambda i, j: (i, j)),
        compiler_params=pltpu.CompilerParams(
            dimension_semantics=("parallel", "parallel"),
            vmem_limit_bytes=32 * 1024 * 1024,
        ),
    )(x2d, valid2d)

    return out2d.reshape(x.shape)


if __name__ == "__main__":
    key = jax.random.PRNGKey(0)
    B, T, D = 2, 8, 32
    x = jax.random.normal(key, (B, T, D), dtype=jnp.float32)
    x_len = np.array([5, 7], dtype=np.int32)   # host-resident lengths -> no sync

    out = squeeze_embedding(x, x_len, batch_first=True)
    out = jax.block_until_ready(out)

    # reference: truncate to max length + zero-mask the padding tail
    max_len = int(np.max(x_len))
    t_idx = jnp.arange(max_len)[None, :, None]
    ref = jnp.where(t_idx < jnp.asarray(x_len)[:, None, None], x[:, :max_len, :], 0.0)
    assert out.shape == (B, max_len, D), out.shape
    assert jnp.allclose(out, ref), "mismatch vs reference (batch_first=True)"

    # time-major path (batch_first=False), handled without data transposes
    x_tb = jnp.transpose(x, (1, 0, 2))
    out_tb = jax.block_until_ready(squeeze_embedding(x_tb, x_len, batch_first=False))
    assert out_tb.shape == (max_len, B, D), out_tb.shape
    assert jnp.allclose(out_tb, jnp.transpose(ref, (1, 0, 2))), "mismatch (batch_first=False)"

    print("KERNEL_OK")
</pallas_src>

<mosaic_0001>
module attributes {stable_mosaic.version = 11 : i64} {
  func.func @_mask_rows_kernel(%arg0: i32, %arg1: i32, %arg2: memref<14x32xf32, #tpu.memory_space<vmem>>, %arg3: memref<14x1xi32, #tpu.memory_space<vmem>>, %arg4: memref<14x32xf32, #tpu.memory_space<vmem>>) attributes {dimension_semantics = [#tpu.dimension_semantics<parallel>, #tpu.dimension_semantics<parallel>], iteration_bounds = array<i64: 1, 1>, scalar_prefetch = 0 : i64, scratch_operands = 0 : i64, tpu.core_type = #tpu.core_type<tc>, window_params = [{transform_indices = @transform_0, window_bounds = array<i64: 14, 32>}, {transform_indices = @transform_1, window_bounds = array<i64: 14, 1>}, {transform_indices = @transform_2, window_bounds = array<i64: 14, 32>}]} {
    %c0 = arith.constant 0 : index
    %c0_0 = arith.constant 0 : index
    %0 = vector.load %arg3[%c0, %c0_0] : memref<14x1xi32, #tpu.memory_space<vmem>>, vector<14x1xi32>
    %c0_i32 = arith.constant 0 : i32
    %1 = vector.broadcast %c0_i32 : i32 to vector<14x1xi32>
    %2 = arith.cmpi ne, %0, %1 : vector<14x1xi32>
    %c0_1 = arith.constant 0 : index
    %c0_2 = arith.constant 0 : index
    %3 = vector.load %arg2[%c0_1, %c0_2] : memref<14x32xf32, #tpu.memory_space<vmem>>, vector<14x32xf32>
    %cst = arith.constant 0.000000e+00 : f32
    %4 = vector.shape_cast %2 : vector<14x1xi1> to vector<14x1xi1>
    %5 = vector.broadcast %4 : vector<14x1xi1> to vector<14x32xi1>
    %6 = vector.broadcast %cst : f32 to vector<14x32xf32>
    %7 = arith.select %5, %3, %6 : vector<14x32xi1>, vector<14x32xf32>
    %c0_3 = arith.constant 0 : index
    %c0_4 = arith.constant 0 : index
    %8 = vector.load %arg4[%c0_3, %c0_4] : memref<14x32xf32, #tpu.memory_space<vmem>>, vector<14x32xf32>
    tpu.vector_store %arg4[%c0_3, %c0_4], %7 {strides = array<i32>} : memref<14x32xf32, #tpu.memory_space<vmem>>, vector<14x32xf32>,
    return
  }
  func.func @transform_0(%arg0: i32, %arg1: i32) -> (i32, i32) {
    %c0_i32 = arith.constant 0 : i32
    return %arg0, %arg1 : i32, i32
  }
  func.func @transform_1(%arg0: i32, %arg1: i32) -> (i32, i32) {
    %c0_i32 = arith.constant 0 : i32
    %c0_i32_0 = arith.constant 0 : i32
    return %arg0, %c0_i32 : i32, i32
  }
  func.func @transform_2(%arg0: i32, %arg1: i32) -> (i32, i32) {
    %c0_i32 = arith.constant 0 : i32
    return %arg0, %arg1 : i32, i32
  }
}

</mosaic_0001>

<llo_original>
// kernel: tpu_custom_call.1
$region0: #{tpu_custom_call.1}
  #allocation0 [shape = 'u32[]', space=smem, size = 0x4, offset = 0x4, fixed_abs, tag = 'smem constant byte address 0x4 - core index']
  #allocation1 [shape = 'u32[144,128]{1,0:T(1,128)}', space=vmem, size = 0x12000, scoped, tag = 'internal scratch']
  %s0 = inlined_call_operand.vmem [shape: f32[14,32], index: 0, kind: input, shape index: {}]
  %s1 = inlined_call_operand.vmem [shape: s32[14,1], index: 1, kind: input, shape index: {}]
  %s2 = inlined_call_operand.hbm [shape: f32[14,32], index: 2, kind: output, shape index: {}]
  %s3 = sld [smem:[#allocation0]]
  $region18: #{tpu_custom_call.1} parent=0
    _
  %s5 = ssub.s32 1, %s3
  %s6 = scalar_select 0, %s5, %s3
  $region1: #{tpu_custom_call.1} parent=0
    #allocation2 [shape = 'u8[8192]{0}', space=vmem, size = 0x2000, scoped, tag = 'output window, operand 0, single buffered']
    #allocation3 [shape = 's32[1]{0}', space=sflag, size = 0x4, scoped, tag = 'scoped memory for tpu_custom_call.1']
    %7 = vsyncpa [#allocation3], 0
    // Predicated region
    $region2: #{tpu_custom_call.1} parent=1 // pred_check
      _
    $region3: #{tpu_custom_call.1} parent=1 // pred_check_branch
      %9 = sbr.rel (0) target = $region5
    $region4: #{tpu_custom_call.1} parent=1 // pred_region
      _
    $region5: #{tpu_custom_call.1} parent=1 // pred_fallthru
      _
    // Predicated region
    $region6: #{tpu_custom_call.1} parent=1 // pred_check
      _
    $region7: #{tpu_custom_call.1} parent=1 // pred_check_branch
      %11 = sbr.rel (0) target = $region9
    $region8: #{tpu_custom_call.1} parent=1 // pred_region
      _
    $region9: #{tpu_custom_call.1} parent=1 // pred_fallthru
      _
    %v12 = vld [vmem:[%s1] sm:$0xff]
    %v13 = vld [vmem:[%s1 + $0x8] sm:$0x3f]
    %vm14 = vcmp.ne.s32.totalorder %v12, 0
    %vm15 = vcmp.ne.s32.totalorder %v13, 0
    %v16 = vld [vmem:[%s0] sm:$0xff]
    %v17 = vld [vmem:[%s0 + $0x8] sm:$0x3f]
    %v18 = vsel %vm14, 1, 0
    %v19 = vsel %vm15, 1, 0
    %20 = vset.pattern.permute.xlu0 0
    %21 = vperm.xlu0 %20, %v18
    %v22 = vpop.permute.xlu0 %21
    %23 = vset.pattern.permute.xlu0 0
    %24 = vperm.xlu0 %23, %v19
    %v25 = vpop.permute.xlu0 %24
    %vm26 = vcmp.eq.s32.totalorder %v22, 1
    %vm27 = vcmp.eq.s32.totalorder %v25, 1
    %v28 = vsel %vm26, %v16, 0.0
    %v29 = vsel %vm27, %v17, 0.0
    %vm30 = vcmask 261120
    %31 = vst.msk [vmem:[#allocation2] sm:$0xff] %vm30, %v28
    %vm32 = vcmask 259072
    %33 = vst.msk [vmem:[#allocation2 + $0x8] sm:$0x3f] %vm32, %v29
    // Predicated region
    $region10: #{tpu_custom_call.1} parent=1 // pred_check
      _
    $region11: #{tpu_custom_call.1} parent=1 // pred_check_branch
      %35 = sbr.rel (0) target = $region13
    $region12: #{tpu_custom_call.1} parent=1 // pred_region
      %s37 = ssub.s32 256, 256
      %38 = vsyncadd [#allocation3], %s37
      %s39 = sshll.u32 [#allocation2], 4
      %s40 = int_to_ptr.vmem [resolvable:$true] %s39
      %45 = dma.vmem_to_hbm [thread:$0]  %s40, 256, %s2, [#allocation3], 128, 128, 8
    $region13: #{tpu_custom_call.1} parent=1 // pred_fallthru
      _
    // Predicated region
    $region14: #{tpu_custom_call.1} parent=1 // pred_check
      _
    $region15: #{tpu_custom_call.1} parent=1 // pred_check_branch
      %47 = sbr.rel (0) target = $region17
    $region16: #{tpu_custom_call.1} parent=1 // pred_region
      %48 = dma.done [#allocation3], 256
    $region17: #{tpu_custom_call.1} parent=1 // pred_fallthru
      _
    %49 = vsyncpa [#allocation3], 1

</llo_original>
